<compile_context>
chip_gen: v6e
topology: v6e:2x2x1
jax: 0.10.0
libtpu: 0.0.40
codegen_flags: <defaults>
</compile_context>

<pallas_src>
import jax
import jax.numpy as jnp
from jax.experimental import pallas as pl
from jax.experimental.pallas import tpu as pltpu


def _fused_gemm_kernel(x_ref, w_ref, out_ref):
    # x_ref  : (tile_m, K*2)  f32 im2col rows
    # w_ref  : (K*2, Dp)      f32 fused (conv @ dense) weight, lane-padded
    # out_ref: (tile_m, Dp)   bf16 (or f32); dot accumulates in f32
    out_ref[...] = jnp.dot(
        x_ref[...], w_ref[...], preferred_element_type=jnp.float32
    ).astype(out_ref.dtype)


def _round_up(x, m):
    return ((x + m - 1) // m) * m


def _cdiv(a, b):
    return -(-a // b)


def location_layer(attention_weights_cat, w_conv, w_dense, *,
                   tile_m=2048, out_dtype=jnp.bfloat16):
    """attention_weights_cat: (B, 2, T)  -- NCW, same as the PyTorch module.
       w_conv : (n_filters, 2, kernel_size)  -- Conv1d weight (bias=False)
       w_dense: (attention_dim, n_filters)   -- Linear weight (bias=False)
       returns: (B, T, attention_dim) in `out_dtype`.
    """
    B, C, T = attention_weights_cat.shape
    F_, Cw, K = w_conv.shape
    assert C == 2 and Cw == 2, "LocationLayer conv expects 2 input channels"
    assert K % 2 == 1, "even kernel_size 'same' padding not supported"
    assert w_dense.shape[1] == F_
    D = w_dense.shape[0]
    pad = (K - 1) // 2

    # ---- fuse conv weight and dense weight into one (K*2, Dp) matrix --------
    wc = jnp.transpose(w_conv, (2, 1, 0)).astype(jnp.float32)   # (K, 2, F)
    wd = jnp.transpose(w_dense, (1, 0)).astype(jnp.float32)     # (F, D)
    w_fused = jnp.einsum("kcf,fd->kcd", wc, wd).reshape(K * C, D)

    # Lane-pad attention_dim only when required (no-op when D % 128 == 0).
    Dp = _round_up(D, 128)
    if Dp != D:
        w_fused = jnp.pad(w_fused, ((0, 0), (0, Dp - D)))

    # ---- im2col in the wrapper: (B*T, K*2) f32 rows --------------------------
    x = jnp.transpose(attention_weights_cat, (0, 2, 1))          # (B, T, 2)
    x_pad = jnp.pad(x, ((0, 0), (pad, pad), (0, 0)))             # (B, T+K-1, 2)
    cols = jnp.stack([x_pad[:, k:k + T, :] for k in range(K)], axis=2)  # (B,T,K,2)
    rows = cols.reshape(B * T, K * C).astype(jnp.float32)        # (M, K*2)

    M = B * T
    Kc = K * C
    out_bytes = jnp.dtype(out_dtype).itemsize

    # ---- pick the row-tile size ----------------------------------------------
    # Keep >= 2 row tiles when M allows (megacore / v7x 2-TC sharding), and keep
    # the double-buffered per-step VMEM comfortably under v7x's 64 MiB.
    tile_m = min(tile_m, max(8, _round_up(_cdiv(M, 2), 8)))

    def vmem_footprint(t):
        return (2 * t * Kc * 4            # double-buffered f32 row tiles
                + 2 * t * Dp * out_bytes  # double-buffered output tiles
                + 2 * Kc * Dp * 4)        # fused weight (constant block index)

    while tile_m > 8 and vmem_footprint(tile_m) > (24 << 20):
        tile_m = max(8, _round_up(tile_m // 2, 8))

    grid_m = pl.cdiv(M, tile_m)
    vmem_limit = int(min(64 << 20,
                         max(16 << 20, vmem_footprint(tile_m) + (4 << 20))))

    out = pl.pallas_call(
        _fused_gemm_kernel,
        out_shape=jax.ShapeDtypeStruct((M, Dp), out_dtype),
        grid=(grid_m,),
        in_specs=[
            pl.BlockSpec((tile_m, Kc), lambda i: (i, 0)),   # row tile
            # Constant block index: Pallas keeps the fused weight resident and
            # skips re-DMA after the first grid step.
            pl.BlockSpec((Kc, Dp), lambda i: (0, 0)),
        ],
        out_specs=pl.BlockSpec((tile_m, Dp), lambda i: (i, 0)),
        compiler_params=pltpu.CompilerParams(
            dimension_semantics=("parallel",),
            vmem_limit_bytes=vmem_limit),
        cost_estimate=pl.CostEstimate(
            flops=2 * M * Kc * Dp,
            transcendentals=0,
            bytes_accessed=M * Kc * 4 + Kc * Dp * 4 + M * Dp * out_bytes),
    )(rows, w_fused)

    res = out if Dp == D else out[:, :D]
    return res.reshape(B, T, D)


if __name__ == "__main__":
    B, T = 2, 16
    n_filters, ksize, attn_dim = 8, 5, 32

    key = jax.random.PRNGKey(0)
    k1, k2, k3 = jax.random.split(key, 3)

    # input attention_weights_cat: (B, 2, T) like the PyTorch module
    x = jax.random.normal(k1, (B, 2, T), jnp.float32)

    # deterministic xavier-uniform-style init (linear gain for conv, tanh for dense)
    fan_in_c, fan_out_c = 2 * ksize, n_filters * ksize
    lim_c = (6.0 / (fan_in_c + fan_out_c)) ** 0.5
    w_conv = jax.random.uniform(k2, (n_filters, 2, ksize), jnp.float32,
                                -lim_c, lim_c)
    gain_tanh = 5.0 / 3.0
    lim_d = gain_tanh * (6.0 / (n_filters + attn_dim)) ** 0.5
    w_dense = jax.random.uniform(k3, (attn_dim, n_filters), jnp.float32,
                                 -lim_d, lim_d)

    def reference(xin):
        # pure-JAX f32 reference of the PyTorch forward
        p = (ksize - 1) // 2
        hid = jax.lax.conv_general_dilated(
            xin, w_conv, window_strides=(1,), padding=[(p, p)],
            dimension_numbers=("NCH", "OIH", "NCH"))          # (B, F, T)
        return jnp.einsum("bft,df->btd", hid, w_dense)        # (B, T, D)

    out = jax.block_until_ready(location_layer(x, w_conv, w_dense))
    ref = reference(x)
    assert out.shape == (B, T, attn_dim), out.shape
    # f32 in-kernel math, bf16 output cast -> ~0.4% relative error vs f32 ref.
    err = float(jnp.max(jnp.abs(out.astype(jnp.float32) - ref)))
    assert jnp.allclose(out.astype(jnp.float32), ref, atol=3e-2, rtol=3e-2), err

    # Ragged case: M % tile_m != 0 exercises Pallas' masked boundary stores.
    B2, T2 = 3, 10
    x2 = jax.random.normal(jax.random.PRNGKey(1), (B2, 2, T2), jnp.float32)
    out2 = jax.block_until_ready(location_layer(x2, w_conv, w_dense, tile_m=16))
    ref2 = reference(x2)
    assert out2.shape == (B2, T2, attn_dim), out2.shape
    err2 = float(jnp.max(jnp.abs(out2.astype(jnp.float32) - ref2)))
    assert jnp.allclose(out2.astype(jnp.float32), ref2, atol=3e-2, rtol=3e-2), err2

    print("KERNEL_OK")
</pallas_src>

<mosaic_0001>
module attributes {stable_mosaic.version = 11 : i64} {
  func.func @_fused_gemm_kernel(%arg0: i32, %arg1: memref<16x10xf32, #tpu.memory_space<vmem>>, %arg2: memref<10x128xf32, #tpu.memory_space<vmem>>, %arg3: memref<16x128xbf16, #tpu.memory_space<vmem>>) attributes {dimension_semantics = [#tpu.dimension_semantics<parallel>], iteration_bounds = array<i64: 2>, scalar_prefetch = 0 : i64, scratch_operands = 0 : i64, tpu.core_type = #tpu.core_type<tc>, window_params = [{transform_indices = @transform_0, window_bounds = array<i64: 16, 10>}, {pipeline_mode = #tpu.pipeline_mode<synchronous>, transform_indices = @transform_1, window_bounds = array<i64: 10, 128>}, {transform_indices = @transform_2, window_bounds = array<i64: 16, 128>}]} {
    %c0 = arith.constant 0 : index
    %c0_0 = arith.constant 0 : index
    %0 = vector.load %arg1[%c0, %c0_0] : memref<16x10xf32, #tpu.memory_space<vmem>>, vector<16x10xf32>
    %c0_1 = arith.constant 0 : index
    %c0_2 = arith.constant 0 : index
    %1 = vector.load %arg2[%c0_1, %c0_2] : memref<10x128xf32, #tpu.memory_space<vmem>>, vector<10x128xf32>
    %cst = arith.constant dense<0.000000e+00> : vector<16x128xf32>
    %2 = tpu.matmul %0, %1, %cst {dimension_numbers = #tpu.dot_dimension_numbers<[1], [0], [0], [1], [0, 0, 1, 1], [], []>} : vector<16x10xf32>, vector<10x128xf32>, vector<16x128xf32> -> vector<16x128xf32>
    %3 = arith.truncf %2 : vector<16x128xf32> to vector<16x128xbf16>
    %c0_3 = arith.constant 0 : index
    %c0_4 = arith.constant 0 : index
    %4 = vector.load %arg3[%c0_3, %c0_4] : memref<16x128xbf16, #tpu.memory_space<vmem>>, vector<16x128xbf16>
    tpu.vector_store %arg3[%c0_3, %c0_4], %3 {strides = array<i32>} : memref<16x128xbf16, #tpu.memory_space<vmem>>, vector<16x128xbf16>,
    return
  }
  func.func @transform_0(%arg0: i32) -> (i32, i32) {
    %c0_i32 = arith.constant 0 : i32
    %c0_i32_0 = arith.constant 0 : i32
    return %arg0, %c0_i32 : i32, i32
  }
  func.func @transform_1(%arg0: i32) -> (i32, i32) {
    %c0_i32 = arith.constant 0 : i32
    %c0_i32_0 = arith.constant 0 : i32
    %c0_i32_1 = arith.constant 0 : i32
    return %c0_i32, %c0_i32_0 : i32, i32
  }
  func.func @transform_2(%arg0: i32) -> (i32, i32) {
    %c0_i32 = arith.constant 0 : i32
    %c0_i32_0 = arith.constant 0 : i32
    return %arg0, %c0_i32 : i32, i32
  }
}

</mosaic_0001>

<llo_original>
// kernel: tpu_custom_call.1
$region0: #{tpu_custom_call.1}
  #allocation0 [shape = 'u32[]', space=smem, size = 0x4, offset = 0x4, fixed_abs, tag = 'smem constant byte address 0x4 - core index']
  #allocation1 [shape = 'u32[144,128]{1,0:T(1,128)}', space=vmem, size = 0x12000, scoped, tag = 'internal scratch']
  %s0 = inlined_call_operand.vmem [shape: f32[32,10], index: 0, kind: input, shape index: {}]
  %s1 = inlined_call_operand.vmem [shape: f32[10,128], index: 1, kind: input, shape index: {}]
  %s2 = inlined_call_operand.hbm [shape: bf16[32,128], index: 2, kind: output, shape index: {}]
  %s3 = sld [smem:[#allocation0]]
  $region41: #{tpu_custom_call.1} parent=0
    _
  %s5 = ssub.s32 1, %s3
  %s6 = scalar_select 0, %s5, %s3
  $region1: #{tpu_custom_call.1} parent=0
    #allocation2 [shape = 'u8[8192]{0}', space=vmem, size = 0x2000, scoped, tag = 'output window, operand 0']
    #allocation3 [shape = 's32[2]{0}', space=sflag, size = 0x8, scoped, tag = 'scoped memory for tpu_custom_call.1']
    %7 = vsyncpa [#allocation3], 0
    %s8 = scalar_lea.sflag [#allocation3], 1
    %9 = vsyncpa %s8, 0
    loop: start=0, step=1, limit=4
    $region2: #{tpu_custom_call.1} parent=1 // loop_pre_header
      _
    $region3: #{tpu_custom_call.1} parent=1 // loop_header
      %s11 = sphi 0, %s15
      %p12 = scmp.ge.s32.totalorder %s11, 4
      %s21 = sphi 0, %s23
      %s24 = sphi 0, %s21
      %s25 = sphi 0, %s24
      %s41 = sphi 0, %s25
      %s45 = sphi 0, %s45
      %s47 = sphi 0, %s45
      %s48 = sphi 0, %s47
      %s62 = sphi 0, %s48
      %s68 = sphi 0, %s70
      %s71 = sphi 0, %s68
      %s72 = sphi 0, %s71
      %s88 = sphi 0, %s72
    $region4: #{tpu_custom_call.1} parent=1 // loop_header_branch
      %14 = sbr.rel (%p12) target = $region8
    $region5: #{tpu_custom_call.1} parent=1 // loop_body
      %s16 = ssub.s32 %s11, 1
      %s17 = ssub.s32 %s11, 2
      %s18 = sadd.s32 %s11, 1
      %s19 = ssub.s32 %s11, %s18
      %p20 = scmp.eq.s32.totalorder %s19, 0
      %s22 = sadd.s32 %s21, 1
      %s23 = scalar_select %p20, %s21, %s22
      %p26 = pneg %p20
      %p27 = scmp.eq.s32.totalorder %s11, 1
      %p28 = por %p26, %p27
      %p29 = scmp.ne.s32.totalorder %s21, %s24
      %p30 = scmp.eq.s32.totalorder %s11, 0
      %p31 = por %p29, %p30
      %p32 = scmp.ne.s32.totalorder %s21, %s24
      %p33 = scmp.eq.s32.totalorder %s16, 1
      %p34 = por %p32, %p33
      %p35 = scmp.ne.s32.totalorder %s24, %s25
      %p36 = scmp.eq.s32.totalorder %s16, 0
      %p37 = por %p35, %p36
      %p38 = scmp.ne.s32.totalorder %s24, %s25
      %p39 = scmp.eq.s32.totalorder %s17, 1
      %p40 = por %p38, %p39
      %p42 = scmp.ne.s32.totalorder %s25, %s41
      %p43 = scmp.eq.s32.totalorder %s17, 0
      %p44 = por %p42, %p43
      %s46 = sadd.s32 %s45, 1
      %p49 = scmp.eq.s32.totalorder %s11, 1
      %p50 = scmp.ne.s32.totalorder %s45, %s47
      %p51 = scmp.eq.s32.totalorder %s11, 0
      %p52 = por %p50, %p51
      %p53 = scmp.ne.s32.totalorder %s45, %s47
      %p54 = scmp.eq.s32.totalorder %s16, 1
      %p55 = por %p53, %p54
      %p56 = scmp.ne.s32.totalorder %s47, %s48
      %p57 = scmp.eq.s32.totalorder %s16, 0
      %p58 = por %p56, %p57
      %p59 = scmp.ne.s32.totalorder %s47, %s48
      %p60 = scmp.eq.s32.totalorder %s17, 1
      %p61 = por %p59, %p60
      %p63 = scmp.ne.s32.totalorder %s48, %s62
      %p64 = scmp.eq.s32.totalorder %s17, 0
      %p65 = por %p63, %p64
      %s66 = ssub.s32 %s11, %s18
      %p67 = scmp.eq.s32.totalorder %s66, 0
      %s69 = sadd.s32 %s68, 1
      %s70 = scalar_select %p67, %s68, %s69
      %p73 = pneg %p67
      %p74 = scmp.eq.s32.totalorder %s11, 1
      %p75 = por %p73, %p74
      %p76 = scmp.ne.s32.totalorder %s68, %s71
      %p77 = scmp.eq.s32.totalorder %s11, 0
      %p78 = por %p76, %p77
      %p79 = scmp.ne.s32.totalorder %s68, %s71
      %p80 = scmp.eq.s32.totalorder %s16, 1
      %p81 = por %p79, %p80
      %p82 = scmp.ne.s32.totalorder %s71, %s72
      %p83 = scmp.eq.s32.totalorder %s16, 0
      %p84 = por %p82, %p83
      %p85 = scmp.ne.s32.totalorder %s71, %s72
      %p86 = scmp.eq.s32.totalorder %s17, 1
      %p87 = por %p85, %p86
      %p89 = scmp.ne.s32.totalorder %s72, %s88
      %p90 = scmp.eq.s32.totalorder %s17, 0
      %p91 = por %p89, %p90
      %p92 = scmp.le.s32.totalorder 1, %s11
      %p93 = scmp.lt.s32.totalorder %s11, 3
      %p94 = pnand %p92, %p93
      %p95 = pneg %p94
      // Predicated region
      $region9: #{tpu_custom_call.1} parent=5 // pred_check
        _
      $region10: #{tpu_custom_call.1} parent=5 // pred_check_branch
        %97 = sbr.rel (%p94) target = $region12
      $region11: #{tpu_custom_call.1} parent=5 // pred_region
        %s98 = ssub.s32 %s11, 1
        // Predicated region
        $region13: #{tpu_custom_call.1} parent=11 // pred_check
          %p99 = pneg %p58
        $region14: #{tpu_custom_call.1} parent=11 // pred_check_branch
          %101 = sbr.rel (%p99) target = $region16
        $region15: #{tpu_custom_call.1} parent=11 // pred_region
          _
        $region16: #{tpu_custom_call.1} parent=11 // pred_fallthru
          _
      $region12: #{tpu_custom_call.1} parent=5 // pred_fallthru
        _
      %p102 = scmp.lt.s32.totalorder %s11, 2
      // Predicated region
      $region17: #{tpu_custom_call.1} parent=5 // pred_check
        %p103 = pneg %p102
      $region18: #{tpu_custom_call.1} parent=5 // pred_check_branch
        %105 = sbr.rel (%p103) target = $region20
      $region19: #{tpu_custom_call.1} parent=5 // pred_region
        // Predicated region
        $region21: #{tpu_custom_call.1} parent=19 // pred_check
          %p106 = pneg %p31
        $region22: #{tpu_custom_call.1} parent=19 // pred_check_branch
          %108 = sbr.rel (%p106) target = $region24
        $region23: #{tpu_custom_call.1} parent=19 // pred_region
          %s109 = smul.u32 2, %s11
          %p110 = scmp.lt.s32.totalorder %s109, 3
          %s111 = scalar_select %p110, %s109, 3
          %s112 = smul.addr %s111, 8
          %s113 = scalar_lea.vmem %s0, %s112
          %s114 = smul.u32 2, %s11
        $region24: #{tpu_custom_call.1} parent=19 // pred_fallthru
          _
      $region20: #{tpu_custom_call.1} parent=5 // pred_fallthru
        _
      %p115 = scmp.le.s32.totalorder 1, %s11
      %p116 = scmp.lt.s32.totalorder %s11, 3
      %p117 = pnand %p115, %p116
      %p118 = pneg %p117
      // Predicated region
      $region25: #{tpu_custom_call.1} parent=5 // pred_check
        _
      $region26: #{tpu_custom_call.1} parent=5 // pred_check_branch
        %120 = sbr.rel (%p117) target = $region28
      $region27: #{tpu_custom_call.1} parent=5 // pred_region
        %s121 = ssub.s32 %s11, 1
        %s122 = smul.u32 2, %s16
        %p123 = scmp.lt.s32.totalorder %s122, 3
        %s124 = scalar_select %p123, %s122, 3
        %s125 = smul.addr %s124, 8
        %s126 = scalar_lea.vmem %s0, %s125
        %p127 = pneg %p37
        %p128 = pneg %p34
        %p129 = pneg %p58
        %p130 = pneg %p55
        %p131 = pneg %p84
        %p132 = pneg %p81
        %s133 = sand.u32 %s71, 1
        %s134 = scalar_lea.sflag [#allocation3], %s133
        %s135 = sand.u32 %s71, 1
        %s136 = smul.addr %s135, 8
        %s137 = scalar_lea.vmem [#allocation2], %s136
        %s138 = smul.u32 2, %s16
        %p139 = scmp.lt.s32.totalorder %s138, 3
        %s140 = scalar_select %p139, %s138, 3
        %s141 = smul.addr %s140, 8
        %s142 = scalar_lea.vmem %s0, %s141
        %s143 = smul.u32 2, %s16
        %s144 = smul.u32 2, %s16
        %v145 = vld [vmem:[%s142] sm:$0xff]
        %v146 = vld [vmem:[%s142 + $0x8] sm:$0xff]
        %v147 = vld [vmem:[%s1] sm:$0xff]
        %v148 = vld [vmem:[%s1 + $0x8] sm:$0x3]
        %vm149 = vcmask 80896
        %v151 = vsel %vm149, %v145, 0
        %v154 = vsel %vm149, %v146, 0
        %vm156 = vcmask 1041408
        %v158 = vsel %vm156, %v148, 0
        %160 = vmatprep.subr.mxu0 0.0
        %161 = vmatpush1.msra.mxu0 0.0
        %162 = vmatprep.subr.mxu0 0.0
        %163 = vmatpush1.msra.mxu0 0.0
        %164 = vmatprep.subr.mxu0 0.0
        %165 = vmatpush1.msra.mxu0 0.0
        %166 = vmatprep.subr.mxu0 0.0
        %167 = vmatpush1.msra.mxu0 0.0
        %168 = vmatprep.subr.mxu0 0.0
        %169 = vmatpush1.msra.mxu0 0.0
        %170 = vmatprep.subr.mxu0 0.0
        %171 = vmatpush1.msra.mxu0 0.0
        %172 = vmatprep.subr.mxu0 0.0
        %173 = vmatpush1.msra.mxu0 0.0
        %174 = vmatprep.subr.mxu0 0.0
        %175 = vmatpush1.msra.mxu0 0.0
        %176 = vmatprep.subr.mxu0 0.0
        %177 = vmatpush1.msra.mxu0 0.0
        %178 = vmatprep.subr.mxu0 0.0
        %179 = vmatpush1.msra.mxu0 0.0
        %180 = vmatprep.subr.mxu0 0.0
        %181 = vmatpush1.msra.mxu0 0.0
        %182 = vmatprep.subr.mxu0 0.0
        %183 = vmatpush1.msra.mxu0 0.0
        %184 = vmatprep.subr.mxu0 0.0
        %185 = vmatpush1.msra.mxu0 0.0
        %186 = vmatprep.subr.mxu0 0.0
        %187 = vmatpush1.msra.mxu0 0.0
        %188 = vmatprep.subr.mxu0 0.0
        %189 = vmatpush1.msra.mxu0 %v158
        %190 = vmatprep.subr.mxu0 0.0
        %191 = vmatpush1.msra.mxu0 %v147
        %192 = vmatprep.subr.mxu0 0.0
        %193 = vmatpush2.msra.mxu0 0.0
        %194 = vmatprep.subr.mxu0 0.0
        %195 = vmatpush2.msra.mxu0 0.0
        %196 = vmatprep.subr.mxu0 0.0
        %197 = vmatpush2.msra.mxu0 0.0
        %198 = vmatprep.subr.mxu0 0.0
        %199 = vmatpush2.msra.mxu0 0.0
        %200 = vmatprep.subr.mxu0 0.0
        %201 = vmatpush2.msra.mxu0 0.0
        %202 = vmatprep.subr.mxu0 0.0
        %203 = vmatpush2.msra.mxu0 0.0
        %204 = vmatprep.subr.mxu0 0.0
        %205 = vmatpush2.msra.mxu0 0.0
        %206 = vmatprep.subr.mxu0 0.0
        %207 = vmatpush2.msra.mxu0 0.0
        %208 = vmatprep.subr.mxu0 0.0
        %209 = vmatpush2.msra.mxu0 0.0
        %210 = vmatprep.subr.mxu0 0.0
        %211 = vmatpush2.msra.mxu0 0.0
        %212 = vmatprep.subr.mxu0 0.0
        %213 = vmatpush2.msra.mxu0 0.0
        %214 = vmatprep.subr.mxu0 0.0
        %215 = vmatpush2.msra.mxu0 0.0
        %216 = vmatprep.subr.mxu0 0.0
        %217 = vmatpush2.msra.mxu0 0.0
        %218 = vmatprep.subr.mxu0 0.0
        %219 = vmatpush2.msra.mxu0 0.0
        %220 = vmatprep.subr.mxu0 0.0
        %221 = vmatpush2.msra.mxu0 0.0
        %222 = vmatprep.subr.mxu0 0.0
        %223 = vmatpush2.msra.mxu0 0.0
        %224 = vmatprep.mubr.f32.mxu0 0.0
        %225 = vmatmul.mubr.f32.gmra.mxu0 %v151
        %v226 = vpop.f32.mrf.mxu0
        %v227 = vadd.f32 0.0, %v226
        %v228 = vpop.f32.mrf.mxu0
        %229 = vmatprep.mubr.f32.mxu0 0.0
        %230 = vmatmul.mubr.f32.gmra.mxu0 %v154
        %v231 = vpop.f32.mrf.mxu0
        %v232 = vadd.f32 0.0, %v231
        %v233 = vpop.f32.mrf.mxu0
        %234 = vdwg.mxu0
        %v235 = vpack.c.bf16 %v232, %v227
        %v237 = vunpack.c.l.b16 %v235
        %v238 = vunpack.c.h.b16 %v235
        %v239 = vpack.c.b16 %v237, %v237
        %v240 = vpack.c.b16 %v238, %v238
        %243 = vst [vmem:[%s137] sm:$0xf] %v239
        %244 = vst [vmem:[%s137 + $0x4] sm:$0xf] %v240
        %s245 = sand.u32 %s71, 1
        %s246 = scalar_lea.sflag [#allocation3], %s245
        %s247 = sand.u32 %s71, 1
        %s248 = smul.addr %s247, 8
        %s249 = scalar_lea.vmem [#allocation2], %s248
        // Predicated region
        $region29: #{tpu_custom_call.1} parent=27 // pred_check
          %p250 = pneg %p81
        $region30: #{tpu_custom_call.1} parent=27 // pred_check_branch
          %252 = sbr.rel (%p250) target = $region32
        $region31: #{tpu_custom_call.1} parent=27 // pred_region
          %s253 = smul.u32 2, %s16
          %s255 = ssub.s32 128, 128
          %256 = vsyncadd %s246, %s255
          %s257 = smul.addr %s253, 64
          %s258 = scalar_lea.hbm %s2, %s257
          %s259 = sshll.u32 %s249, 4
          %s260 = int_to_ptr.vmem [resolvable:$true] %s259
          %265 = dma.vmem_to_hbm [thread:$0]  %s260, 128, %s258, %s246, 64, 64, 4
        $region32: #{tpu_custom_call.1} parent=27 // pred_fallthru
          _
      $region28: #{tpu_custom_call.1} parent=5 // pred_fallthru
        _
      %p266 = scmp.le.s32.totalorder 2, %s11
      // Predicated region
      $region33: #{tpu_custom_call.1} parent=5 // pred_check
        %p267 = pneg %p266
      $region34: #{tpu_custom_call.1} parent=5 // pred_check_branch
        %269 = sbr.rel (%p267) target = $region36
      $region35: #{tpu_custom_call.1} parent=5 // pred_region
        %s270 = ssub.s32 %s11, 2
        // Predicated region
        $region37: #{tpu_custom_call.1} parent=35 // pred_check
          %p271 = pneg %p87
        $region38: #{tpu_custom_call.1} parent=35 // pred_check_branch
          %273 = sbr.rel (%p271) target = $region40
        $region39: #{tpu_custom_call.1} parent=35 // pred_region
          %s274 = sand.u32 %s72, 1
          %s275 = scalar_lea.sflag [#allocation3], %s274
          %s276 = sand.u32 %s72, 1
          %s277 = smul.addr %s276, 8
          %s278 = scalar_lea.vmem [#allocation2], %s277
          %279 = dma.done %s275, 128
        $region40: #{tpu_custom_call.1} parent=35 // pred_fallthru
          _
      $region36: #{tpu_custom_call.1} parent=5 // pred_fallthru
        _
    $region6: #{tpu_custom_call.1} parent=1 // loop_footer
      %s15 = sadd.s32 1, %s11
    $region7: #{tpu_custom_call.1} parent=1 // loop_footer_branch
      %10 = sbr.rel target = $region3
    $region8: #{tpu_custom_call.1} parent=1 // loop_exit
      _
    %280 = vsyncpa [#allocation3], 1
    %s281 = scalar_lea.sflag [#allocation3], 1
    %282 = vsyncpa %s281, 1

</llo_original>
